<compile_context>
chip_gen: v7x
topology: tpu7x:2x2x1
jax: 0.10.0
libtpu: 0.0.40
codegen_flags: <defaults>
</compile_context>

<pallas_src>
import functools
from typing import NamedTuple, Tuple

import jax
import jax.numpy as jnp
from jax import lax
from jax.experimental import pallas as pl
from jax.experimental.pallas import tpu as pltpu

_LANE = 128
_BF16_SUBLANE = 16


def _round_up(n, m):
    return (n + m - 1) // m * m


class DotaNetMeta(NamedTuple):
    dims: Tuple[int, ...]       # (d_in, S1, S2, C1, C2, C3, d_out)
    w_offs: Tuple[int, ...]     # sublane offsets of the weight segments in the bf16 slab
    w_rows: Tuple[int, ...]
    w_cols: Tuple[int, ...]
    b_offs: Tuple[int, ...]     # lane offsets of the bias segments in the f32 slab
    b_widths: Tuple[int, ...]
    fuse_wc1: bool              # 256-wide fused Wc1 pass (v6e/v7x) vs split (v5e & older)


def _default_fuse_wc1():
    """Fuse the counter first layer only on chips with a 256-wide MXU (v6e/v7x)."""
    try:
        kind = jax.devices()[0].device_kind.lower()
        return ("v6" in kind) or ("v7" in kind)
    except Exception:
        return False


def init_params(key, d_in, s1, s2, c1, c2, c3, d_out):
    """Deterministic synthetic parameters; shapes mirror the PyTorch module.

    Weights are stored in bfloat16 (MXU-native, half the DMA bytes); biases f32.
    """
    keys = jax.random.split(key, 12)

    def lin(kw, kb, fan_in, fan_out):
        scale = 1.0 / jnp.sqrt(jnp.float32(fan_in))
        w = jax.random.uniform(kw, (fan_in, fan_out), jnp.float32, -scale, scale)
        b = jax.random.uniform(kb, (1, fan_out), jnp.float32, -scale, scale)
        return w.astype(jnp.bfloat16), b

    w1, b1 = lin(keys[0], keys[1], d_in, s1)        # synergy Linear(D_in, S1)
    w2, b2 = lin(keys[2], keys[3], s1, s2)          # synergy Linear(S1, S2)
    wc1, bc1 = lin(keys[4], keys[5], 2 * s2, c1)    # counter Linear(2*S2, C1)
    wc2, bc2 = lin(keys[6], keys[7], c1, c2)        # counter Linear(C1, C2)
    wc3, bc3 = lin(keys[8], keys[9], c2, c3)        # counter Linear(C2, C3)
    wc4, bc4 = lin(keys[10], keys[11], c3, d_out)   # counter Linear(C3, D_out)
    return dict(w1=w1, b1=b1, w2=w2, b2=b2, wc1=wc1, bc1=bc1,
                wc2=wc2, bc2=bc2, wc3=wc3, bc3=bc3, wc4=wc4, bc4=bc4)


def prepack_params(params, *, fuse_wc1=None):
    """One-time packing of DotaNet parameters into two VMEM-friendly slabs.

    * six weight matrices -> ONE bf16 slab (rows stacked at 16-sublane offsets,
      columns padded to a common lane-multiple width).
    * six bias vectors    -> ONE lane-aligned f32 row.
    * Wc1 is stored pre-fused as [Wc1[:S2] | Wc1[S2:]]  (S2, 2*C1).
    * the head weight Linear(C3, 1) is stored transposed (1, C3) so the head
      runs with the batch on the lane axis (lane-dense output store).
    Returns (packed_arrays, static meta).
    """
    d_in, S1 = params["w1"].shape
    S2 = params["w2"].shape[1]
    C1 = params["wc1"].shape[1]
    C2 = params["wc2"].shape[1]
    C3 = params["wc3"].shape[1]
    d_out = params["wc4"].shape[1]

    wc1f = jnp.concatenate([params["wc1"][:S2], params["wc1"][S2:]], axis=1)  # (S2, 2*C1)
    head = params["wc4"].T if d_out == 1 else params["wc4"]

    w_segs = [params["w1"], params["w2"], wc1f, params["wc2"], params["wc3"], head]
    max_cols = max(_round_up(int(s.shape[1]), _LANE) for s in w_segs)
    w_offs, w_rows, w_cols, w_padded = [], [], [], []
    off = 0
    for s in w_segs:
        s = s.astype(jnp.bfloat16)
        r, c = int(s.shape[0]), int(s.shape[1])
        w_offs.append(off); w_rows.append(r); w_cols.append(c)
        rp = _round_up(r, _BF16_SUBLANE)          # bf16 sublane packing
        w_padded.append(jnp.pad(s, ((0, rp - r), (0, max_cols - c))))
        off += rp
    w_pack = jnp.concatenate(w_padded, axis=0)    # (sum rows, max_cols) bf16

    b_segs = [params["b1"], params["b2"], params["bc1"],
              params["bc2"], params["bc3"], params["bc4"]]
    b_offs, b_widths, b_padded = [], [], []
    boff = 0
    for s in b_segs:
        s = s.astype(jnp.float32).reshape(1, -1)
        w = int(s.shape[1])
        b_offs.append(boff); b_widths.append(w)
        pw = _round_up(w, _LANE)
        b_padded.append(jnp.pad(s, ((0, 0), (0, pw - w))))
        boff += pw
    bias_pack = jnp.concatenate(b_padded, axis=1)  # (1, total) f32

    if fuse_wc1 is None:
        fuse_wc1 = _default_fuse_wc1()

    meta = DotaNetMeta(dims=(d_in, S1, S2, C1, C2, C3, d_out),
                       w_offs=tuple(w_offs), w_rows=tuple(w_rows), w_cols=tuple(w_cols),
                       b_offs=tuple(b_offs), b_widths=tuple(b_widths),
                       fuse_wc1=bool(fuse_wc1))
    return dict(w=w_pack, b=bias_pack), meta


@functools.partial(jax.jit, static_argnames=("meta", "tile_b"))
def dotanet_forward(x_red, x_blue, packed, *, meta, tile_b=512):
    """DotaNet forward pass (eval mode) as a single gridded Pallas TPU call."""
    d_in, S1, S2, C1, C2, C3, d_out = meta.dims
    B, d = x_red.shape
    assert d == d_in and x_blue.shape == (B, d_in)

    w_pack, bias_pack = packed["w"], packed["b"]

    # Batch tiling: big tiles amortize the ~0.35us/grid-step overhead; the grid
    # axis is "parallel" so v7x shards it over its 2 TensorCores. f32 inputs
    # need 8-row alignment, bf16 inputs 16-row, for the in-VMEM red|blue stack.
    sub = 32 // x_red.dtype.itemsize
    tb = _round_up(max(sub, min(tile_b, _round_up(B, sub))), sub)
    Bp = _round_up(B, tb)
    if Bp != B:
        x_red = jnp.pad(x_red, ((0, Bp - B), (0, 0)))
        x_blue = jnp.pad(x_blue, ((0, Bp - B), (0, 0)))
    grid = (Bp // tb,)

    lane_dense_head = (d_out == 1)

    def kernel(xr_ref, xb_ref, w_ref, b_ref, out_ref, xs_ref):
        def wseg(i, c0, c1):
            r0 = meta.w_offs[i]
            return w_ref[r0:r0 + meta.w_rows[i], c0:c1]

        def bseg(i):
            o = meta.b_offs[i]
            return b_ref[:, o:o + meta.b_widths[i]]

        def mm(a, wmat):
            # bf16 MXU inputs, f32 accumulation; elementwise math stays f32
            # (v5e has no bf16 VPU/EUP).
            return jnp.dot(a.astype(jnp.bfloat16), wmat,
                           preferred_element_type=jnp.float32)

        # Stack red|blue on the batch (sublane) axis inside VMEM: the shared
        # synergy net then runs ONCE over both teams (2 matmuls instead of 4).
        xs_ref[0:tb, :] = xr_ref[...]
        xs_ref[tb:2 * tb, :] = xb_ref[...]
        x = xs_ref[...]

        h = jnp.maximum(mm(x, wseg(0, 0, S1)) + bseg(0), 0.0)     # (2tb, S1)
        h = jnp.maximum(mm(h, wseg(1, 0, S2)) + bseg(1), 0.0)     # (2tb, S2)

        # Counter layer 1: concat([r, b], 1) @ Wc1, with Wc1 stored fused as
        # [Wc1[:S2] | Wc1[S2:]] of shape (S2, 2*C1).
        if meta.fuse_wc1:
            # One full-width MXU pass (v6e/v7x 256-wide MXU); the unused cross
            # terms are free padding there.
            hc = mm(h, wseg(2, 0, 2 * C1))                        # (2tb, 2*C1)
            h = hc[:tb, :C1] + hc[tb:, C1:]
        else:
            # v5e (128-wide MXU): two half-width passes, no wasted cross terms.
            h = mm(h[:tb], wseg(2, 0, C1)) + mm(h[tb:], wseg(2, C1, 2 * C1))
        h = jnp.maximum(h + bseg(2), 0.0)                         # (tb, C1)

        # TODO(synk): Dropout(0.5) layers are identity in inference mode; training-mode masking omitted.
        h = jnp.maximum(mm(h, wseg(3, 0, C2)) + bseg(3), 0.0)     # (tb, C2)
        h = jnp.maximum(mm(h, wseg(4, 0, C3)) + bseg(4), 0.0)     # (tb, C3)

        if lane_dense_head:
            # Head Linear(C3, 1) as (1, C3) x (tb, C3)^T -> (1, tb): the batch
            # lands on the LANE axis so the output store is lane-dense instead
            # of a 1-lane masked vst per row.
            logits = lax.dot_general(
                wseg(5, 0, C3), h.astype(jnp.bfloat16),
                (((1,), (1,)), ((), ())),
                preferred_element_type=jnp.float32) + bseg(5)     # (1, tb)
        else:
            logits = mm(h, wseg(5, 0, d_out)) + bseg(5)           # (tb, d_out)

        # Sigmoid: exp on the EUP; exact reciprocal (approx=False) so the
        # probabilities are not EUP-approximate.
        e = jnp.exp(-logits)
        out_ref[...] = pl.reciprocal(1.0 + e, approx=False)

    x_spec = pl.BlockSpec((tb, d_in), lambda i: (i, 0))
    w_spec = pl.BlockSpec(w_pack.shape, lambda i: (0, 0))       # VMEM-resident
    b_spec = pl.BlockSpec(bias_pack.shape, lambda i: (0, 0))    # VMEM-resident
    if lane_dense_head:
        out_shape = jax.ShapeDtypeStruct((1, Bp), jnp.float32)
        out_spec = pl.BlockSpec((1, tb), lambda i: (0, i))
    else:
        out_shape = jax.ShapeDtypeStruct((Bp, d_out), jnp.float32)
        out_spec = pl.BlockSpec((tb, d_out), lambda i: (i, 0))

    flops = (2 * (2 * Bp) * (d_in * S1 + S1 * S2)
             + 2 * Bp * (2 * S2 * C1 + C1 * C2 + C2 * C3 + C3 * d_out))
    bytes_accessed = (2 * Bp * d_in * x_red.dtype.itemsize
                      + w_pack.size * w_pack.dtype.itemsize
                      + bias_pack.size * bias_pack.dtype.itemsize
                      + Bp * d_out * 4)
    cost = pl.CostEstimate(flops=int(flops), transcendentals=int(2 * Bp * d_out),
                           bytes_accessed=int(bytes_accessed))

    out = pl.pallas_call(
        kernel,
        out_shape=out_shape,
        grid=grid,
        in_specs=[x_spec, x_spec, w_spec, b_spec],
        out_specs=out_spec,
        scratch_shapes=[pltpu.VMEM((2 * tb, d_in), x_red.dtype)],
        compiler_params=pltpu.CompilerParams(
            dimension_semantics=("parallel",)),
        cost_estimate=cost,
    )(x_red, x_blue, w_pack, bias_pack)

    if lane_dense_head:
        return out[:, :B].reshape(B, 1)     # back to the PyTorch (B, D_out) shape
    return out[:B]


def dotanet_ref(x_red, x_blue, p):
    """Pure-JAX reference (eval-mode dropout = identity), f32 math on bf16 weights."""
    f32 = lambda w: w.astype(jnp.float32)

    def synergy(x):
        h = jnp.maximum(x @ f32(p["w1"]) + p["b1"], 0.0)
        return jnp.maximum(h @ f32(p["w2"]) + p["b2"], 0.0)

    r, b = synergy(x_red), synergy(x_blue)
    h = jnp.concatenate([r, b], axis=1)
    h = jnp.maximum(h @ f32(p["wc1"]) + p["bc1"], 0.0)
    h = jnp.maximum(h @ f32(p["wc2"]) + p["bc2"], 0.0)
    h = jnp.maximum(h @ f32(p["wc3"]) + p["bc3"], 0.0)
    return jax.nn.sigmoid(h @ f32(p["wc4"]) + p["bc4"])


if __name__ == "__main__":
    # Small shapes consistent with the module's config (D_in, S1, S2, C1, C2, C3, D_out).
    B, D_IN, S1, S2, C1, C2, C3, D_OUT = 8, 64, 128, 64, 128, 64, 32, 1

    key = jax.random.PRNGKey(0)
    k_params, k_red, k_blue = jax.random.split(key, 3)
    params = init_params(k_params, D_IN, S1, S2, C1, C2, C3, D_OUT)
    packed, meta = prepack_params(params)        # one-time prepack (hoisted out of forward)

    x_red = jax.random.normal(k_red, (B, D_IN), jnp.float32)
    x_blue = jax.random.normal(k_blue, (B, D_IN), jnp.float32)

    out = jax.block_until_ready(dotanet_forward(x_red, x_blue, packed, meta=meta))
    ref = jax.block_until_ready(dotanet_ref(x_red, x_blue, params))

    assert out.shape == (B, D_OUT)
    # bf16 matmul inputs (MXU-native) vs f32-activation reference -> few-1e-3 tolerance.
    assert jnp.allclose(out, ref, atol=5e-3, rtol=5e-3), \
        float(jnp.max(jnp.abs(out - ref)))

    print("KERNEL_OK")
</pallas_src>

<mosaic_0001>
module attributes {stable_mosaic.version = 11 : i64} {
  func.func @kernel(%arg0: i32, %arg1: memref<8x64xf32, #tpu.memory_space<vmem>>, %arg2: memref<8x64xf32, #tpu.memory_space<vmem>>, %arg3: memref<464x256xbf16, #tpu.memory_space<vmem>>, %arg4: memref<1x768xf32, #tpu.memory_space<vmem>>, %arg5: memref<1x8xf32, #tpu.memory_space<vmem>>, %arg6: memref<16x64xf32, #tpu.memory_space<vmem>>) attributes {dimension_semantics = [#tpu.dimension_semantics<parallel>], iteration_bounds = array<i64: 1>, scalar_prefetch = 0 : i64, scratch_operands = 1 : i64, tpu.core_type = #tpu.core_type<tc>, window_params = [{transform_indices = @transform_0, window_bounds = array<i64: 8, 64>}, {transform_indices = @transform_1, window_bounds = array<i64: 8, 64>}, {pipeline_mode = #tpu.pipeline_mode<synchronous>, transform_indices = @transform_2, window_bounds = array<i64: 464, 256>}, {pipeline_mode = #tpu.pipeline_mode<synchronous>, transform_indices = @transform_3, window_bounds = array<i64: 1, 768>}, {transform_indices = @transform_4, window_bounds = array<i64: 1, 8>}]} {
    %c0 = arith.constant 0 : index
    %c0_0 = arith.constant 0 : index
    %0 = vector.load %arg1[%c0, %c0_0] : memref<8x64xf32, #tpu.memory_space<vmem>>, vector<8x64xf32>
    %c0_1 = arith.constant 0 : index
    %c0_2 = arith.constant 0 : index
    %1 = vector.load %arg6[%c0_1, %c0_2] : memref<16x64xf32, #tpu.memory_space<vmem>>, vector<8x64xf32>
    tpu.vector_store %arg6[%c0_1, %c0_2], %0 {strides = array<i32>} : memref<16x64xf32, #tpu.memory_space<vmem>>, vector<8x64xf32>,
    %c0_3 = arith.constant 0 : index
    %c0_4 = arith.constant 0 : index
    %2 = vector.load %arg2[%c0_3, %c0_4] : memref<8x64xf32, #tpu.memory_space<vmem>>, vector<8x64xf32>
    %c8 = arith.constant 8 : index
    %c0_5 = arith.constant 0 : index
    %3 = vector.load %arg6[%c8, %c0_5] : memref<16x64xf32, #tpu.memory_space<vmem>>, vector<8x64xf32>
    tpu.vector_store %arg6[%c8, %c0_5], %2 {strides = array<i32>} : memref<16x64xf32, #tpu.memory_space<vmem>>, vector<8x64xf32>,
    %c0_6 = arith.constant 0 : index
    %c0_7 = arith.constant 0 : index
    %4 = vector.load %arg6[%c0_6, %c0_7] : memref<16x64xf32, #tpu.memory_space<vmem>>, vector<16x64xf32>
    %c0_8 = arith.constant 0 : index
    %c0_9 = arith.constant 0 : index
    %5 = vector.load %arg3[%c0_8, %c0_9] : memref<464x256xbf16, #tpu.memory_space<vmem>>, vector<64x128xbf16>
    %6 = arith.truncf %4 : vector<16x64xf32> to vector<16x64xbf16>
    %cst = arith.constant dense<0.000000e+00> : vector<16x128xf32>
    %7 = tpu.matmul %6, %5, %cst {dimension_numbers = #tpu.dot_dimension_numbers<[1], [0], [0], [1], [0, 0, 1, 1], [], []>} : vector<16x64xbf16>, vector<64x128xbf16>, vector<16x128xf32> -> vector<16x128xf32>
    %c0_10 = arith.constant 0 : index
    %c0_11 = arith.constant 0 : index
    %8 = vector.load %arg4[%c0_10, %c0_11] : memref<1x768xf32, #tpu.memory_space<vmem>>, vector<1x128xf32>
    %9 = vector.broadcast %8 : vector<1x128xf32> to vector<16x128xf32>
    %10 = arith.addf %7, %9 : vector<16x128xf32>
    %cst_12 = arith.constant 0.000000e+00 : f32
    %11 = vector.broadcast %cst_12 : f32 to vector<16x128xf32>
    %12 = arith.maximumf %10, %11 : vector<16x128xf32>
    %c64 = arith.constant 64 : index
    %c0_13 = arith.constant 0 : index
    %13 = vector.load %arg3[%c64, %c0_13] : memref<464x256xbf16, #tpu.memory_space<vmem>>, vector<128x64xbf16>
    %14 = arith.truncf %12 : vector<16x128xf32> to vector<16x128xbf16>
    %cst_14 = arith.constant dense<0.000000e+00> : vector<16x64xf32>
    %15 = tpu.matmul %14, %13, %cst_14 {dimension_numbers = #tpu.dot_dimension_numbers<[1], [0], [0], [1], [0, 0, 1, 1], [], []>} : vector<16x128xbf16>, vector<128x64xbf16>, vector<16x64xf32> -> vector<16x64xf32>
    %c0_15 = arith.constant 0 : index
    %c128 = arith.constant 128 : index
    %16 = vector.load %arg4[%c0_15, %c128] : memref<1x768xf32, #tpu.memory_space<vmem>>, vector<1x64xf32>
    %17 = vector.broadcast %16 : vector<1x64xf32> to vector<16x64xf32>
    %18 = arith.addf %15, %17 : vector<16x64xf32>
    %cst_16 = arith.constant 0.000000e+00 : f32
    %19 = vector.broadcast %cst_16 : f32 to vector<16x64xf32>
    %20 = arith.maximumf %18, %19 : vector<16x64xf32>
    %21 = vector.extract_strided_slice %20 {offsets = [0, 0], sizes = [8, 64], strides = [1, 1]} : vector<16x64xf32> to vector<8x64xf32>
    %c192 = arith.constant 192 : index
    %c0_17 = arith.constant 0 : index
    %22 = vector.load %arg3[%c192, %c0_17] : memref<464x256xbf16, #tpu.memory_space<vmem>>, vector<64x128xbf16>
    %23 = arith.truncf %21 : vector<8x64xf32> to vector<8x64xbf16>
    %cst_18 = arith.constant dense<0.000000e+00> : vector<8x128xf32>
    %24 = tpu.matmul %23, %22, %cst_18 {dimension_numbers = #tpu.dot_dimension_numbers<[1], [0], [0], [1], [0, 0, 1, 1], [], []>} : vector<8x64xbf16>, vector<64x128xbf16>, vector<8x128xf32> -> vector<8x128xf32>
    %25 = vector.extract_strided_slice %20 {offsets = [8, 0], sizes = [8, 64], strides = [1, 1]} : vector<16x64xf32> to vector<8x64xf32>
    %c192_19 = arith.constant 192 : index
    %c128_20 = arith.constant 128 : index
    %26 = vector.load %arg3[%c192_19, %c128_20] : memref<464x256xbf16, #tpu.memory_space<vmem>>, vector<64x128xbf16>
    %27 = arith.truncf %25 : vector<8x64xf32> to vector<8x64xbf16>
    %cst_21 = arith.constant dense<0.000000e+00> : vector<8x128xf32>
    %28 = tpu.matmul %27, %26, %cst_21 {dimension_numbers = #tpu.dot_dimension_numbers<[1], [0], [0], [1], [0, 0, 1, 1], [], []>} : vector<8x64xbf16>, vector<64x128xbf16>, vector<8x128xf32> -> vector<8x128xf32>
    %29 = arith.addf %24, %28 : vector<8x128xf32>
    %c0_22 = arith.constant 0 : index
    %c256 = arith.constant 256 : index
    %30 = vector.load %arg4[%c0_22, %c256] : memref<1x768xf32, #tpu.memory_space<vmem>>, vector<1x128xf32>
    %31 = vector.broadcast %30 : vector<1x128xf32> to vector<8x128xf32>
    %32 = arith.addf %29, %31 : vector<8x128xf32>
    %cst_23 = arith.constant 0.000000e+00 : f32
    %33 = vector.broadcast %cst_23 : f32 to vector<8x128xf32>
    %34 = arith.maximumf %32, %33 : vector<8x128xf32>
    %c256_24 = arith.constant 256 : index
    %c0_25 = arith.constant 0 : index
    %35 = vector.load %arg3[%c256_24, %c0_25] : memref<464x256xbf16, #tpu.memory_space<vmem>>, vector<128x64xbf16>
    %36 = arith.truncf %34 : vector<8x128xf32> to vector<8x128xbf16>
    %cst_26 = arith.constant dense<0.000000e+00> : vector<8x64xf32>
    %37 = tpu.matmul %36, %35, %cst_26 {dimension_numbers = #tpu.dot_dimension_numbers<[1], [0], [0], [1], [0, 0, 1, 1], [], []>} : vector<8x128xbf16>, vector<128x64xbf16>, vector<8x64xf32> -> vector<8x64xf32>
    %c0_27 = arith.constant 0 : index
    %c384 = arith.constant 384 : index
    %38 = vector.load %arg4[%c0_27, %c384] : memref<1x768xf32, #tpu.memory_space<vmem>>, vector<1x64xf32>
    %39 = vector.broadcast %38 : vector<1x64xf32> to vector<8x64xf32>
    %40 = arith.addf %37, %39 : vector<8x64xf32>
    %cst_28 = arith.constant 0.000000e+00 : f32
    %41 = vector.broadcast %cst_28 : f32 to vector<8x64xf32>
    %42 = arith.maximumf %40, %41 : vector<8x64xf32>
    %c384_29 = arith.constant 384 : index
    %c0_30 = arith.constant 0 : index
    %43 = vector.load %arg3[%c384_29, %c0_30] : memref<464x256xbf16, #tpu.memory_space<vmem>>, vector<64x32xbf16>
    %44 = arith.truncf %42 : vector<8x64xf32> to vector<8x64xbf16>
    %cst_31 = arith.constant dense<0.000000e+00> : vector<8x32xf32>
    %45 = tpu.matmul %44, %43, %cst_31 {dimension_numbers = #tpu.dot_dimension_numbers<[1], [0], [0], [1], [0, 0, 1, 1], [], []>} : vector<8x64xbf16>, vector<64x32xbf16>, vector<8x32xf32> -> vector<8x32xf32>
    %c0_32 = arith.constant 0 : index
    %c512 = arith.constant 512 : index
    %46 = vector.load %arg4[%c0_32, %c512] : memref<1x768xf32, #tpu.memory_space<vmem>>, vector<1x32xf32>
    %47 = vector.broadcast %46 : vector<1x32xf32> to vector<8x32xf32>
    %48 = arith.addf %45, %47 : vector<8x32xf32>
    %cst_33 = arith.constant 0.000000e+00 : f32
    %49 = vector.broadcast %cst_33 : f32 to vector<8x32xf32>
    %50 = arith.maximumf %48, %49 : vector<8x32xf32>
    %c448 = arith.constant 448 : index
    %c0_34 = arith.constant 0 : index
    %51 = vector.load %arg3[%c448, %c0_34] : memref<464x256xbf16, #tpu.memory_space<vmem>>, vector<1x32xbf16>
    %52 = arith.truncf %50 : vector<8x32xf32> to vector<8x32xbf16>
    %cst_35 = arith.constant dense<0.000000e+00> : vector<1x8xf32>
    %53 = tpu.matmul %51, %52, %cst_35 {dimension_numbers = #tpu.dot_dimension_numbers<[1], [1], [0], [0], [0, 0, 1, 0], [], []>} : vector<1x32xbf16>, vector<8x32xbf16>, vector<1x8xf32> -> vector<1x8xf32>
    %c0_36 = arith.constant 0 : index
    %c640 = arith.constant 640 : index
    %54 = vector.load %arg4[%c0_36, %c640] : memref<1x768xf32, #tpu.memory_space<vmem>>, vector<1x1xf32>
    %55 = vector.broadcast %54 : vector<1x1xf32> to vector<1x8xf32>
    %56 = arith.addf %53, %55 : vector<1x8xf32>
    %cst_37 = arith.constant 0.000000e+00 : f32
    %57 = vector.broadcast %cst_37 : f32 to vector<1x8xf32>
    %58 = arith.subf %57, %56 : vector<1x8xf32>
    %59 = math.exp %58 : vector<1x8xf32>
    %cst_38 = arith.constant 1.000000e+00 : f32
    %60 = vector.broadcast %cst_38 : f32 to vector<1x8xf32>
    %61 = arith.addf %60, %59 : vector<1x8xf32>
    %62 = tpu.reciprocal %61 : vector<1x8xf32> -> vector<1x8xf32>
    %c0_39 = arith.constant 0 : index
    %c0_40 = arith.constant 0 : index
    %63 = vector.load %arg5[%c0_39, %c0_40] : memref<1x8xf32, #tpu.memory_space<vmem>>, vector<1x8xf32>
    tpu.vector_store %arg5[%c0_39, %c0_40], %62 {strides = array<i32>} : memref<1x8xf32, #tpu.memory_space<vmem>>, vector<1x8xf32>,
    return
  }
  func.func @transform_0(%arg0: i32) -> (i32, i32) {
    %c0_i32 = arith.constant 0 : i32
    %c0_i32_0 = arith.constant 0 : i32
    return %arg0, %c0_i32 : i32, i32
  }
  func.func @transform_1(%arg0: i32) -> (i32, i32) {
    %c0_i32 = arith.constant 0 : i32
    %c0_i32_0 = arith.constant 0 : i32
    return %arg0, %c0_i32 : i32, i32
  }
  func.func @transform_2(%arg0: i32) -> (i32, i32) {
    %c0_i32 = arith.constant 0 : i32
    %c0_i32_0 = arith.constant 0 : i32
    %c0_i32_1 = arith.constant 0 : i32
    return %c0_i32, %c0_i32_0 : i32, i32
  }
  func.func @transform_3(%arg0: i32) -> (i32, i32) {
    %c0_i32 = arith.constant 0 : i32
    %c0_i32_0 = arith.constant 0 : i32
    %c0_i32_1 = arith.constant 0 : i32
    return %c0_i32, %c0_i32_0 : i32, i32
  }
  func.func @transform_4(%arg0: i32) -> (i32, i32) {
    %c0_i32 = arith.constant 0 : i32
    %c0_i32_0 = arith.constant 0 : i32
    return %c0_i32, %arg0 : i32, i32
  }
}

</mosaic_0001>

<llo_original>
// kernel: dotanet_forward.1
$region0: #{dotanet_forward.1}
  #allocation0 [shape = 'u32[]', space=smem, size = 0x4, offset = 0x4, fixed_abs, tag = 'smem constant byte address 0x4 - core index']
  #allocation1 [shape = 'u32[144,128]{1,0:T(1,128)}', space=vmem, size = 0x12000, scoped, tag = 'internal scratch']
  #allocation2 [shape = 'f32[16,64]{1,0:T(8,128)}', space=vmem, size = 0x2000, scoped, tag = 'scratch operand']
  %s0 = inlined_call_operand.hbm [shape: f32[8,64], index: 0, kind: input, shape index: {}]
  %s1 = inlined_call_operand.hbm [shape: f32[8,64], index: 1, kind: input, shape index: {}]
  %s2 = inlined_call_operand.hbm [shape: bf16[464,256], index: 2, kind: input, shape index: {}]
  %s3 = inlined_call_operand.vmem [shape: f32[1,768], index: 3, kind: input, shape index: {}]
  %s4 = inlined_call_operand.hbm [shape: f32[1,8], index: 4, kind: output, shape index: {}]
  %s5 = sld [smem:[#allocation0]]
  $region38: #{dotanet_forward.1} parent=0
    _
  %s7 = ssub.s32 1, %s5
  %s8 = scalar_select 0, %s7, %s5
  $region1: #{dotanet_forward.1} parent=0
    #allocation3 [shape = 'u8[4096]{0}', space=vmem, size = 0x1000, scoped, tag = 'input window, operand 0, single buffered']
    #allocation4 [shape = 's32[1]{0}', space=sflag, size = 0x4, scoped, tag = 'scoped memory for dotanet_forward.1']
    #allocation5 [shape = 's32[1]{0}', space=sflag, size = 0x4, scoped, tag = 'scoped memory for dotanet_forward.1']
    #allocation6 [shape = 'u8[4096]{0}', space=vmem, size = 0x1000, scoped, tag = 'input window, operand 1, single buffered']
    #allocation7 [shape = 's32[1]{0}', space=sflag, size = 0x4, scoped, tag = 'scoped memory for dotanet_forward.1']
    #allocation8 [shape = 'u8[237568]{0}', space=vmem, size = 0x3a000, scoped, tag = 'input window, operand 2, single buffered']
    #allocation9 [shape = 'u8[512]{0}', space=vmem, size = 0x400, scoped, tag = 'output window, operand 0, single buffered']
    %9 = vsyncpa [#allocation4], 0
    %10 = vsyncpa [#allocation7], 0
    %11 = vsyncpa [#allocation5], 0
    // Predicated region
    $region2: #{dotanet_forward.1} parent=1 // pred_check
      _
    $region3: #{dotanet_forward.1} parent=1 // pred_check_branch
      %13 = sbr.rel (0) target = $region5
    $region4: #{dotanet_forward.1} parent=1 // pred_region
      %s15 = ssub.s32 128, 128
      %16 = vsyncadd [#allocation4], %s15
      %s18 = sshll.u32 [#allocation3], 4
      %s19 = int_to_ptr.vmem [resolvable:$true] %s18
      %21 = dma.hbm_to_vmem [thread:$0]  %s0, 128, %s19, [#allocation4]
    $region5: #{dotanet_forward.1} parent=1 // pred_fallthru
      _
    // Predicated region
    $region6: #{dotanet_forward.1} parent=1 // pred_check
      _
    $region7: #{dotanet_forward.1} parent=1 // pred_check_branch
      %23 = sbr.rel (0) target = $region9
    $region8: #{dotanet_forward.1} parent=1 // pred_region
      %s25 = ssub.s32 128, 128
      %26 = vsyncadd [#allocation7], %s25
      %s28 = sshll.u32 [#allocation6], 4
      %s29 = int_to_ptr.vmem [resolvable:$true] %s28
      %31 = dma.hbm_to_vmem [thread:$0]  %s1, 128, %s29, [#allocation7]
    $region9: #{dotanet_forward.1} parent=1 // pred_fallthru
      _
    // Predicated region
    $region10: #{dotanet_forward.1} parent=1 // pred_check
      _
    $region11: #{dotanet_forward.1} parent=1 // pred_check_branch
      %33 = sbr.rel (0) target = $region13
    $region12: #{dotanet_forward.1} parent=1 // pred_region
      %s35 = ssub.s32 7424, 7424
      %36 = vsyncadd [#allocation7], %s35
      %s37 = sshll.u32 [#allocation8], 4
      %s38 = int_to_ptr.vmem [resolvable:$true] %s37
      %43 = dma.hbm_to_vmem [thread:$0]  %s2, 7424, %s38, [#allocation7], 128, 128, 8
    $region13: #{dotanet_forward.1} parent=1 // pred_fallthru
      _
    // Predicated region
    $region14: #{dotanet_forward.1} parent=1 // pred_check
      _
    $region15: #{dotanet_forward.1} parent=1 // pred_check_branch
      %45 = sbr.rel (0) target = $region17
    $region16: #{dotanet_forward.1} parent=1 // pred_region
      _
    $region17: #{dotanet_forward.1} parent=1 // pred_fallthru
      _
    // Predicated region
    $region18: #{dotanet_forward.1} parent=1 // pred_check
      _
    $region19: #{dotanet_forward.1} parent=1 // pred_check_branch
      %47 = sbr.rel (0) target = $region21
    $region20: #{dotanet_forward.1} parent=1 // pred_region
      %48 = dma.done [#allocation4], 128
    $region21: #{dotanet_forward.1} parent=1 // pred_fallthru
      _
    // Predicated region
    $region22: #{dotanet_forward.1} parent=1 // pred_check
      _
    $region23: #{dotanet_forward.1} parent=1 // pred_check_branch
      %50 = sbr.rel (0) target = $region25
    $region24: #{dotanet_forward.1} parent=1 // pred_region
      %51 = dma.done [#allocation7], 128
    $region25: #{dotanet_forward.1} parent=1 // pred_fallthru
      _
    // Predicated region
    $region26: #{dotanet_forward.1} parent=1 // pred_check
      _
    $region27: #{dotanet_forward.1} parent=1 // pred_check_branch
      %53 = sbr.rel (0) target = $region29
    $region28: #{dotanet_forward.1} parent=1 // pred_region
      %54 = dma.done [#allocation7], 7424
    $region29: #{dotanet_forward.1} parent=1 // pred_fallthru
      _
    %v56 = vld [vmem:[#allocation3] sm:$0xff]
    %vm57 = vcmask 523264
    %58 = vst.msk [vmem:[#allocation2] sm:$0xff] %vm57, %v56
    %v59 = vld [vmem:[#allocation6] sm:$0xff]
    %60 = vst.msk [vmem:[#allocation2 + $0x8] sm:$0xff] %vm57, %v59
    %v61 = vld [vmem:[#allocation2] sm:$0xff]
    %v62 = vld [vmem:[#allocation2 + $0x8] sm:$0xff]
    %v63 = vld [vmem:[#allocation8] sm:$0xf]
    %v64 = vld [vmem:[#allocation8 + $0x8] sm:$0xf]
    %v65 = vld [vmem:[#allocation8 + $0x10] sm:$0xf]
    %v66 = vld [vmem:[#allocation8 + $0x18] sm:$0xf]
    %v67 = vld [vmem:[#allocation8 + $0x20] sm:$0xf]
    %v68 = vld [vmem:[#allocation8 + $0x28] sm:$0xf]
    %v69 = vld [vmem:[#allocation8 + $0x30] sm:$0xf]
    %v70 = vld [vmem:[#allocation8 + $0x38] sm:$0xf]
    %v71 = vpack.c.bf16 %v62, %v61
    %v72 = vld [vmem:[%s3] sm:$0x1]
    %v74 = vlaneseq
    %v75 = vshrl.u32 %v74, 7
    %v76 = vsub.s32 0, %v75
    %v77 = vrot.slane %v72, %v76
    %v87 = vunpack.c.l.b16 %v63
    %v88 = vunpack.c.l.b16 %v64
    %v89 = vunpack.c.l.b16 %v65
    %v90 = vunpack.c.l.b16 %v66
    %v91 = vunpack.c.l.b16 %v67
    %v92 = vunpack.c.l.b16 %v68
    %v93 = vunpack.c.l.b16 %v69
    %v94 = vunpack.c.l.b16 %v70
    %v95 = vpack.c.b16 %v88, %v87
    %v96 = vpack.c.b16 %v90, %v89
    %v97 = vpack.c.b16 %v92, %v91
    %v98 = vpack.c.b16 %v94, %v93
    %v104 = vsel %vm57, %v71, 0
    %106 = vmatprep.subr.bf16.mxu0 0
    %107 = vmatpush1.bf16.msra.mxu0 %v95
    %108 = vmatprep.subr.bf16.mxu0 0
    %109 = vmatpush1.bf16.msra.mxu0 %v96
    %110 = vmatprep.subr.bf16.mxu0 0
    %111 = vmatpush1.bf16.msra.mxu0 %v97
    %112 = vmatprep.subr.bf16.mxu0 0
    %113 = vmatpush1.bf16.msra.mxu0 %v98
    %114 = vmatprep.subr.bf16.mxu0 0
    %115 = vmatpush1.bf16.msra.mxu0 0
    %116 = vmatprep.subr.bf16.mxu0 0
    %117 = vmatpush1.bf16.msra.mxu0 0
    %118 = vmatprep.subr.bf16.mxu0 0
    %119 = vmatpush1.bf16.msra.mxu0 0
    %120 = vmatprep.subr.bf16.mxu0 0
    %121 = vmatpush1.bf16.msra.mxu0 0
    %122 = vmatprep.subr.bf16.mxu0 0
    %123 = vmatpush1.bf16.msra.mxu0 0
    %124 = vmatprep.subr.bf16.mxu0 0
    %125 = vmatpush1.bf16.msra.mxu0 0
    %126 = vmatprep.subr.bf16.mxu0 0
    %127 = vmatpush1.bf16.msra.mxu0 0
    %128 = vmatprep.subr.bf16.mxu0 0
    %129 = vmatpush1.bf16.msra.mxu0 0
    %130 = vmatprep.subr.bf16.mxu0 0
    %131 = vmatpush1.bf16.msra.mxu0 0
    %132 = vmatprep.subr.bf16.mxu0 0
    %133 = vmatpush1.bf16.msra.mxu0 0
    %134 = vmatprep.subr.bf16.mxu0 0
    %135 = vmatpush1.bf16.msra.mxu0 0
    %136 = vmatprep.subr.bf16.mxu0 0
    %137 = vmatpush1.bf16.msra.mxu0 0
    %138 = vmatprep.mubr.bf16.mxu0 0
    %139 = vmatmul.mubr.bf16.gmra.mrb[0].mxu0 %v104
    %v140 = vpop.f32.mrb[0].mxu0
    %v141 = vadd.f32 %v77, %v140
    %v142 = vpop.f32.mrb[0].mxu0
    %v143 = vpop.f32.mrb[0].mxu0
    %v144 = vadd.f32 %v77, %v143
    %v145 = vpop.f32.mrb[0].mxu0
    %146 = vdwg.mxu0
    %v147 = vmax.f32 %v141, 0.0
    %v148 = vmax.f32 %v144, 0.0
    %v149 = vld [vmem:[#allocation8 + $0x40] sm:$0xf]
    %v150 = vld [vmem:[#allocation8 + $0x48] sm:$0xf]
    %v151 = vld [vmem:[#allocation8 + $0x50] sm:$0xf]
    %v152 = vld [vmem:[#allocation8 + $0x58] sm:$0xf]
    %v153 = vld [vmem:[#allocation8 + $0x60] sm:$0xf]
    %v154 = vld [vmem:[#allocation8 + $0x68] sm:$0xf]
    %v155 = vld [vmem:[#allocation8 + $0x70] sm:$0xf]
    %v156 = vld [vmem:[#allocation8 + $0x78] sm:$0xf]
    %v157 = vld [vmem:[#allocation8 + $0x80] sm:$0xf]
    %v158 = vld [vmem:[#allocation8 + $0x88] sm:$0xf]
    %v159 = vld [vmem:[#allocation8 + $0x90] sm:$0xf]
    %v160 = vld [vmem:[#allocation8 + $0x98] sm:$0xf]
    %v161 = vld [vmem:[#allocation8 + $0xa0] sm:$0xf]
    %v162 = vld [vmem:[#allocation8 + $0xa8] sm:$0xf]
    %v163 = vld [vmem:[#allocation8 + $0xb0] sm:$0xf]
    %v164 = vld [vmem:[#allocation8 + $0xb8] sm:$0xf]
    %v165 = vpack.c.bf16 %v148, %v147
    %v166 = vld [vmem:[%s3 + $0x1] sm:$0x1]
    %v168 = vlaneseq
    %v169 = vshrl.u32 %v168, 7
    %v170 = vsub.s32 0, %v169
    %v171 = vrot.slane %v166, %v170
    %v189 = vunpack.c.l.b16 %v149
    %v190 = vunpack.c.l.b16 %v150
    %v191 = vunpack.c.l.b16 %v151
    %v192 = vunpack.c.l.b16 %v152
    %v193 = vunpack.c.l.b16 %v153
    %v194 = vunpack.c.l.b16 %v154
    %v195 = vunpack.c.l.b16 %v155
    %v196 = vunpack.c.l.b16 %v156
    %v197 = vunpack.c.l.b16 %v157
    %v198 = vunpack.c.l.b16 %v158
    %v199 = vunpack.c.l.b16 %v159
    %v200 = vunpack.c.l.b16 %v160
    %v201 = vunpack.c.l.b16 %v161
    %v202 = vunpack.c.l.b16 %v162
    %v203 = vunpack.c.l.b16 %v163
    %v204 = vunpack.c.l.b16 %v164
    %v205 = vpack.c.b16 %v190, %v189
    %v206 = vpack.c.b16 %v192, %v191
    %v207 = vpack.c.b16 %v194, %v193
    %v208 = vpack.c.b16 %v196, %v195
    %v209 = vpack.c.b16 %v198, %v197
    %v210 = vpack.c.b16 %v200, %v199
    %v211 = vpack.c.b16 %v202, %v201
    %v212 = vpack.c.b16 %v204, %v203
    %221 = vmatprep.subr.bf16.mxu0 0
    %222 = vmatpush1.bf16.msra.mxu0 %v205
    %223 = vmatprep.subr.bf16.mxu0 0
    %224 = vmatpush1.bf16.msra.mxu0 %v206
    %225 = vmatprep.subr.bf16.mxu0 0
    %226 = vmatpush1.bf16.msra.mxu0 %v207
    %227 = vmatprep.subr.bf16.mxu0 0
    %228 = vmatpush1.bf16.msra.mxu0 %v208
    %229 = vmatprep.subr.bf16.mxu0 0
    %230 = vmatpush1.bf16.msra.mxu0 %v209
    %231 = vmatprep.subr.bf16.mxu0 0
    %232 = vmatpush1.bf16.msra.mxu0 %v210
    %233 = vmatprep.subr.bf16.mxu0 0
    %234 = vmatpush1.bf16.msra.mxu0 %v211
    %235 = vmatprep.subr.bf16.mxu0 0
    %236 = vmatpush1.bf16.msra.mxu0 %v212
    %237 = vmatprep.subr.bf16.mxu0 0
    %238 = vmatpush1.bf16.msra.mxu0 0
    %239 = vmatprep.subr.bf16.mxu0 0
    %240 = vmatpush1.bf16.msra.mxu0 0
    %241 = vmatprep.subr.bf16.mxu0 0
    %242 = vmatpush1.bf16.msra.mxu0 0
    %243 = vmatprep.subr.bf16.mxu0 0
    %244 = vmatpush1.bf16.msra.mxu0 0
    %245 = vmatprep.subr.bf16.mxu0 0
    %246 = vmatpush1.bf16.msra.mxu0 0
    %247 = vmatprep.subr.bf16.mxu0 0
    %248 = vmatpush1.bf16.msra.mxu0 0
    %249 = vmatprep.subr.bf16.mxu0 0
    %250 = vmatpush1.bf16.msra.mxu0 0
    %251 = vmatprep.subr.bf16.mxu0 0
    %252 = vmatpush1.bf16.msra.mxu0 0
    %253 = vmatprep.mubr.bf16.mxu0 0
    %254 = vmatmul.mubr.bf16.gmra.mrb[0].mxu0 %v165
    %v255 = vpop.f32.mrb[0].mxu0
    %v256 = vadd.f32 %v171, %v255
    %v257 = vpop.f32.mrb[0].mxu0
    %v258 = vpop.f32.mrb[0].mxu0
    %v259 = vadd.f32 %v171, %v258
    %v260 = vpop.f32.mrb[0].mxu0
    %261 = vdwg.mxu0
    %v262 = vmax.f32 %v256, 0.0
    %v263 = vmax.f32 %v259, 0.0
    %v264 = vld [vmem:[#allocation8 + $0xc0] sm:$0xf]
    %v265 = vld [vmem:[#allocation8 + $0xc8] sm:$0xf]
    %v266 = vld [vmem:[#allocation8 + $0xd0] sm:$0xf]
    %v267 = vld [vmem:[#allocation8 + $0xd8] sm:$0xf]
    %v268 = vld [vmem:[#allocation8 + $0xe0] sm:$0xf]
    %v269 = vld [vmem:[#allocation8 + $0xe8] sm:$0xf]
    %v270 = vld [vmem:[#allocation8 + $0xf0] sm:$0xf]
    %v271 = vld [vmem:[#allocation8 + $0xf8] sm:$0xf]
    %v272 = vpack.c.bf16 %v262, %v262
    %v273 = vld [vmem:[#allocation8 + $0xc4] sm:$0xf]
    %v274 = vld [vmem:[#allocation8 + $0xcc] sm:$0xf]
    %v275 = vld [vmem:[#allocation8 + $0xd4] sm:$0xf]
    %v276 = vld [vmem:[#allocation8 + $0xdc] sm:$0xf]
    %v277 = vld [vmem:[#allocation8 + $0xe4] sm:$0xf]
    %v278 = vld [vmem:[#allocation8 + $0xec] sm:$0xf]
    %v279 = vld [vmem:[#allocation8 + $0xf4] sm:$0xf]
    %v280 = vld [vmem:[#allocation8 + $0xfc] sm:$0xf]
    %v281 = vpack.c.bf16 %v263, %v263
    %v290 = vunpack.c.l.b16 %v273
    %v291 = vunpack.c.l.b16 %v274
    %v292 = vunpack.c.l.b16 %v275
    %v293 = vunpack.c.l.b16 %v276
    %v294 = vunpack.c.l.b16 %v277
    %v295 = vunpack.c.l.b16 %v278
    %v296 = vunpack.c.l.b16 %v279
    %v297 = vunpack.c.l.b16 %v280
    %v298 = vpack.c.b16 %v291, %v290
    %v299 = vpack.c.b16 %v293, %v292
    %v300 = vpack.c.b16 %v295, %v294
    %v301 = vpack.c.b16 %v297, %v296
    %v307 = vsel %vm57, %v281, 0
    %309 = vmatprep.subr.bf16.mxu0 0
    %310 = vmatpush1.bf16.msra.mxu0 %v298
    %311 = vmatprep.subr.bf16.mxu0 0
    %312 = vmatpush1.bf16.msra.mxu0 %v299
    %313 = vmatprep.subr.bf16.mxu0 0
    %314 = vmatpush1.bf16.msra.mxu0 %v300
    %315 = vmatprep.subr.bf16.mxu0 0
    %316 = vmatpush1.bf16.msra.mxu0 %v301
    %317 = vmatprep.subr.bf16.mxu0 0
    %318 = vmatpush1.bf16.msra.mxu0 0
    %319 = vmatprep.subr.bf16.mxu0 0
    %320 = vmatpush1.bf16.msra.mxu0 0
    %321 = vmatprep.subr.bf16.mxu0 0
    %322 = vmatpush1.bf16.msra.mxu0 0
    %323 = vmatprep.subr.bf16.mxu0 0
    %324 = vmatpush1.bf16.msra.mxu0 0
    %325 = vmatprep.subr.bf16.mxu0 0
    %326 = vmatpush1.bf16.msra.mxu0 0
    %327 = vmatprep.subr.bf16.mxu0 0
    %328 = vmatpush1.bf16.msra.mxu0 0
    %329 = vmatprep.subr.bf16.mxu0 0
    %330 = vmatpush1.bf16.msra.mxu0 0
    %331 = vmatprep.subr.bf16.mxu0 0
    %332 = vmatpush1.bf16.msra.mxu0 0
    %333 = vmatprep.subr.bf16.mxu0 0
    %334 = vmatpush1.bf16.msra.mxu0 0
    %335 = vmatprep.subr.bf16.mxu0 0
    %336 = vmatpush1.bf16.msra.mxu0 0
    %337 = vmatprep.subr.bf16.mxu0 0
    %338 = vmatpush1.bf16.msra.mxu0 0
    %339 = vmatprep.subr.bf16.mxu0 0
    %340 = vmatpush1.bf16.msra.mxu0 0
    %341 = vmatprep.mubr.bf16.mxu0 0
    %342 = vmatmul.mubr.bf16.gmra.mrb[0].mxu0 %v307
    %v343 = vpop.f32.mrb[0].mxu0
    %v344 = vadd.f32 0.0, %v343
    %v345 = vpop.f32.mrb[0].mxu0
    %v346 = vpop.f32.mrb[0].mxu0
    %v347 = vpop.f32.mrb[0].mxu0
    %348 = vdwg.mxu0
    %v357 = vunpack.c.l.b16 %v264
    %v358 = vunpack.c.l.b16 %v265
    %v359 = vunpack.c.l.b16 %v266
    %v360 = vunpack.c.l.b16 %v267
    %v361 = vunpack.c.l.b16 %v268
    %v362 = vunpack.c.l.b16 %v269
    %v363 = vunpack.c.l.b16 %v270
    %v364 = vunpack.c.l.b16 %v271
    %v365 = vpack.c.b16 %v358, %v357
    %v366 = vpack.c.b16 %v360, %v359
    %v367 = vpack.c.b16 %v362, %v361
    %v368 = vpack.c.b16 %v364, %v363
    %v374 = vsel %vm57, %v272, 0
    %376 = vmatprep.subr.bf16.mxu0 0
    %377 = vmatpush1.bf16.msra.mxu0 %v365
    %378 = vmatprep.subr.bf16.mxu0 0
    %379 = vmatpush1.bf16.msra.mxu0 %v366
    %380 = vmatprep.subr.bf16.mxu0 0
    %381 = vmatpush1.bf16.msra.mxu0 %v367
    %382 = vmatprep.subr.bf16.mxu0 0
    %383 = vmatpush1.bf16.msra.mxu0 %v368
    %384 = vmatprep.subr.bf16.mxu0 0
    %385 = vmatpush1.bf16.msra.mxu0 0
    %386 = vmatprep.subr.bf16.mxu0 0
    %387 = vmatpush1.bf16.msra.mxu0 0
    %388 = vmatprep.subr.bf16.mxu0 0
    %389 = vmatpush1.bf16.msra.mxu0 0
    %390 = vmatprep.subr.bf16.mxu0 0
    %391 = vmatpush1.bf16.msra.mxu0 0
    %392 = vmatprep.subr.bf16.mxu0 0
    %393 = vmatpush1.bf16.msra.mxu0 0
    %394 = vmatprep.subr.bf16.mxu0 0
    %395 = vmatpush1.bf16.msra.mxu0 0
    %396 = vmatprep.subr.bf16.mxu0 0
    %397 = vmatpush1.bf16.msra.mxu0 0
    %398 = vmatprep.subr.bf16.mxu0 0
    %399 = vmatpush1.bf16.msra.mxu0 0
    %400 = vmatprep.subr.bf16.mxu0 0
    %401 = vmatpush1.bf16.msra.mxu0 0
    %402 = vmatprep.subr.bf16.mxu0 0
    %403 = vmatpush1.bf16.msra.mxu0 0
    %404 = vmatprep.subr.bf16.mxu0 0
    %405 = vmatpush1.bf16.msra.mxu0 0
    %406 = vmatprep.subr.bf16.mxu0 0
    %407 = vmatpush1.bf16.msra.mxu0 0
    %408 = vmatprep.mubr.bf16.mxu0 0
    %409 = vmatmul.mubr.bf16.gmra.mrb[0].mxu0 %v374
    %v410 = vpop.f32.mrb[0].mxu0
    %v411 = vadd.f32 %v344, %v410
    %v412 = vpop.f32.mrb[0].mxu0
    %v413 = vpop.f32.mrb[0].mxu0
    %v414 = vpop.f32.mrb[0].mxu0
    %415 = vdwg.mxu0
    %v416 = vld [vmem:[%s3 + $0x2] sm:$0x1]
    %v418 = vlaneseq
    %v419 = vshrl.u32 %v418, 7
    %v420 = vsub.s32 0, %v419
    %v421 = vrot.slane %v416, %v420
    %v423 = vadd.f32 %v411, %v421
    %v424 = vmax.f32 %v423, 0.0
    %v425 = vld [vmem:[#allocation8 + $0x100] sm:$0xf]
    %v426 = vld [vmem:[#allocation8 + $0x108] sm:$0xf]
    %v427 = vld [vmem:[#allocation8 + $0x110] sm:$0xf]
    %v428 = vld [vmem:[#allocation8 + $0x118] sm:$0xf]
    %v429 = vld [vmem:[#allocation8 + $0x120] sm:$0xf]
    %v430 = vld [vmem:[#allocation8 + $0x128] sm:$0xf]
    %v431 = vld [vmem:[#allocation8 + $0x130] sm:$0xf]
    %v432 = vld [vmem:[#allocation8 + $0x138] sm:$0xf]
    %v433 = vld [vmem:[#allocation8 + $0x140] sm:$0xf]
    %v434 = vld [vmem:[#allocation8 + $0x148] sm:$0xf]
    %v435 = vld [vmem:[#allocation8 + $0x150] sm:$0xf]
    %v436 = vld [vmem:[#allocation8 + $0x158] sm:$0xf]
    %v437 = vld [vmem:[#allocation8 + $0x160] sm:$0xf]
    %v438 = vld [vmem:[#allocation8 + $0x168] sm:$0xf]
    %v439 = vld [vmem:[#allocation8 + $0x170] sm:$0xf]
    %v440 = vld [vmem:[#allocation8 + $0x178] sm:$0xf]
    %v441 = vpack.c.bf16 %v424, %v424
    %v442 = vld [vmem:[%s3 + $0x3] sm:$0x1]
    %v444 = vlaneseq
    %v445 = vshrl.u32 %v444, 7
    %v446 = vsub.s32 0, %v445
    %v447 = vrot.slane %v442, %v446
    %v465 = vunpack.c.l.b16 %v425
    %v466 = vunpack.c.l.b16 %v426
    %v467 = vunpack.c.l.b16 %v427
    %v468 = vunpack.c.l.b16 %v428
    %v469 = vunpack.c.l.b16 %v429
    %v470 = vunpack.c.l.b16 %v430
    %v471 = vunpack.c.l.b16 %v431
    %v472 = vunpack.c.l.b16 %v432
    %v473 = vunpack.c.l.b16 %v433
    %v474 = vunpack.c.l.b16 %v434
    %v475 = vunpack.c.l.b16 %v435
    %v476 = vunpack.c.l.b16 %v436
    %v477 = vunpack.c.l.b16 %v437
    %v478 = vunpack.c.l.b16 %v438
    %v479 = vunpack.c.l.b16 %v439
    %v480 = vunpack.c.l.b16 %v440
    %v481 = vpack.c.b16 %v466, %v465
    %v482 = vpack.c.b16 %v468, %v467
    %v483 = vpack.c.b16 %v470, %v469
    %v484 = vpack.c.b16 %v472, %v471
    %v485 = vpack.c.b16 %v474, %v473
    %v486 = vpack.c.b16 %v476, %v475
    %v487 = vpack.c.b16 %v478, %v477
    %v488 = vpack.c.b16 %v480, %v479
    %497 = vmatprep.subr.bf16.mxu0 0
    %498 = vmatpush1.bf16.msra.mxu0 %v481
    %499 = vmatprep.subr.bf16.mxu0 0
    %500 = vmatpush1.bf16.msra.mxu0 %v482
    %501 = vmatprep.subr.bf16.mxu0 0
    %502 = vmatpush1.bf16.msra.mxu0 %v483
    %503 = vmatprep.subr.bf16.mxu0 0
    %504 = vmatpush1.bf16.msra.mxu0 %v484
    %505 = vmatprep.subr.bf16.mxu0 0
    %506 = vmatpush1.bf16.msra.mxu0 %v485
    %507 = vmatprep.subr.bf16.mxu0 0
    %508 = vmatpush1.bf16.msra.mxu0 %v486
    %509 = vmatprep.subr.bf16.mxu0 0
    %510 = vmatpush1.bf16.msra.mxu0 %v487
    %511 = vmatprep.subr.bf16.mxu0 0
    %512 = vmatpush1.bf16.msra.mxu0 %v488
    %513 = vmatprep.subr.bf16.mxu0 0
    %514 = vmatpush1.bf16.msra.mxu0 0
    %515 = vmatprep.subr.bf16.mxu0 0
    %516 = vmatpush1.bf16.msra.mxu0 0
    %517 = vmatprep.subr.bf16.mxu0 0
    %518 = vmatpush1.bf16.msra.mxu0 0
    %519 = vmatprep.subr.bf16.mxu0 0
    %520 = vmatpush1.bf16.msra.mxu0 0
    %521 = vmatprep.subr.bf16.mxu0 0
    %522 = vmatpush1.bf16.msra.mxu0 0
    %523 = vmatprep.subr.bf16.mxu0 0
    %524 = vmatpush1.bf16.msra.mxu0 0
    %525 = vmatprep.subr.bf16.mxu0 0
    %526 = vmatpush1.bf16.msra.mxu0 0
    %527 = vmatprep.subr.bf16.mxu0 0
    %528 = vmatpush1.bf16.msra.mxu0 0
    %529 = vmatprep.mubr.bf16.mxu0 0
    %530 = vmatmul.mubr.bf16.gmra.mrb[0].mxu0 %v441
    %v531 = vpop.f32.mrb[0].mxu0
    %v532 = vadd.f32 %v447, %v531
    %v533 = vpop.f32.mrb[0].mxu0
    %v534 = vpop.f32.mrb[0].mxu0
    %v535 = vpop.f32.mrb[0].mxu0
    %536 = vdwg.mxu0
    %v537 = vmax.f32 %v532, 0.0
    %v538 = vld [vmem:[#allocation8 + $0x180] sm:$0xf]
    %v539 = vld [vmem:[#allocation8 + $0x188] sm:$0xf]
    %v540 = vld [vmem:[#allocation8 + $0x190] sm:$0xf]
    %v541 = vld [vmem:[#allocation8 + $0x198] sm:$0xf]
    %v542 = vld [vmem:[#allocation8 + $0x1a0] sm:$0xf]
    %v543 = vld [vmem:[#allocation8 + $0x1a8] sm:$0xf]
    %v544 = vld [vmem:[#allocation8 + $0x1b0] sm:$0xf]
    %v545 = vld [vmem:[#allocation8 + $0x1b8] sm:$0xf]
    %v546 = vpack.c.bf16 %v537, %v537
    %v547 = vld [vmem:[%s3 + $0x4] sm:$0x1]
    %v549 = vlaneseq
    %v550 = vshrl.u32 %v549, 7
    %v551 = vsub.s32 0, %v550
    %v552 = vrot.slane %v547, %v551
    %v562 = vunpack.c.l.b16 %v538
    %v563 = vunpack.c.l.b16 %v539
    %v564 = vunpack.c.l.b16 %v540
    %v565 = vunpack.c.l.b16 %v541
    %v566 = vunpack.c.l.b16 %v542
    %v567 = vunpack.c.l.b16 %v543
    %v568 = vunpack.c.l.b16 %v544
    %v569 = vunpack.c.l.b16 %v545
    %v570 = vpack.c.b16 %v563, %v562
    %v571 = vpack.c.b16 %v565, %v564
    %v572 = vpack.c.b16 %v567, %v566
    %v573 = vpack.c.b16 %v569, %v568
    %v579 = vsel %vm57, %v546, 0
    %581 = vmatprep.subr.bf16.mxu0 0
    %582 = vmatpush1.bf16.msra.mxu0 %v570
    %583 = vmatprep.subr.bf16.mxu0 0
    %584 = vmatpush1.bf16.msra.mxu0 %v571
    %585 = vmatprep.subr.bf16.mxu0 0
    %586 = vmatpush1.bf16.msra.mxu0 %v572
    %587 = vmatprep.subr.bf16.mxu0 0
    %588 = vmatpush1.bf16.msra.mxu0 %v573
    %589 = vmatprep.subr.bf16.mxu0 0
    %590 = vmatpush1.bf16.msra.mxu0 0
    %591 = vmatprep.subr.bf16.mxu0 0
    %592 = vmatpush1.bf16.msra.mxu0 0
    %593 = vmatprep.subr.bf16.mxu0 0
    %594 = vmatpush1.bf16.msra.mxu0 0
    %595 = vmatprep.subr.bf16.mxu0 0
    %596 = vmatpush1.bf16.msra.mxu0 0
    %597 = vmatprep.subr.bf16.mxu0 0
    %598 = vmatpush1.bf16.msra.mxu0 0
    %599 = vmatprep.subr.bf16.mxu0 0
    %600 = vmatpush1.bf16.msra.mxu0 0
    %601 = vmatprep.subr.bf16.mxu0 0
    %602 = vmatpush1.bf16.msra.mxu0 0
    %603 = vmatprep.subr.bf16.mxu0 0
    %604 = vmatpush1.bf16.msra.mxu0 0
    %605 = vmatprep.subr.bf16.mxu0 0
    %606 = vmatpush1.bf16.msra.mxu0 0
    %607 = vmatprep.subr.bf16.mxu0 0
    %608 = vmatpush1.bf16.msra.mxu0 0
    %609 = vmatprep.subr.bf16.mxu0 0
    %610 = vmatpush1.bf16.msra.mxu0 0
    %611 = vmatprep.subr.bf16.mxu0 0
    %612 = vmatpush1.bf16.msra.mxu0 0
    %613 = vmatprep.mubr.bf16.mxu0 0
    %614 = vmatmul.mubr.bf16.gmra.mrb[0].mxu0 %v579
    %v615 = vpop.f32.mrb[0].mxu0
    %v616 = vadd.f32 %v552, %v615
    %v617 = vpop.f32.mrb[0].mxu0
    %v618 = vpop.f32.mrb[0].mxu0
    %v619 = vpop.f32.mrb[0].mxu0
    %620 = vdwg.mxu0
    %v621 = vmax.f32 %v616, 0.0
    %v622 = vld [vmem:[#allocation8 + $0x1c0] sm:$0x1]
    %v623 = vpack.c.bf16 %v621, %v621
    %v624 = vld [vmem:[%s3 + $0x5] sm:$0x1]
    %626 = vset.pattern.permute.xlu0 0
    %627 = vperm.xlu0 %626, %v624
    %v628 = vpop.permute.xlu0 %627
    %v630 = vlaneseq
    %v631 = vshrl.u32 %v630, 7
    %v632 = vsub.s32 0, %v631
    %v633 = vrot.slane %v628, %v632
    %vm634 = vcmask 261120
    %v636 = vsel %vm634, %v622, 0
    %v639 = vsel %vm634, %v623, 0
    %641 = vmatprep.subr.bf16.mxu0 0
    %642 = vmatpush1.bf16.xpose.msra.mxu0 %v639
    %643 = vmatprep.subr.bf16.mxu0 0
    %644 = vmatpush1.bf16.xpose.msra.mxu0 0
    %645 = vmatprep.subr.bf16.mxu0 0
    %646 = vmatpush1.bf16.xpose.msra.mxu0 0
    %647 = vmatprep.subr.bf16.mxu0 0
    %648 = vmatpush1.bf16.xpose.msra.mxu0 0
    %649 = vmatprep.subr.bf16.mxu0 0
    %650 = vmatpush1.bf16.xpose.msra.mxu0 0
    %651 = vmatprep.subr.bf16.mxu0 0
    %652 = vmatpush1.bf16.xpose.msra.mxu0 0
    %653 = vmatprep.subr.bf16.mxu0 0
    %654 = vmatpush1.bf16.xpose.msra.mxu0 0
    %655 = vmatprep.subr.bf16.mxu0 0
    %656 = vmatpush1.bf16.xpose.msra.mxu0 0
    %657 = vmatprep.subr.bf16.mxu0 0
    %658 = vmatpush1.bf16.xpose.msra.mxu0 0
    %659 = vmatprep.subr.bf16.mxu0 0
    %660 = vmatpush1.bf16.xpose.msra.mxu0 0
    %661 = vmatprep.subr.bf16.mxu0 0
    %662 = vmatpush1.bf16.xpose.msra.mxu0 0
    %663 = vmatprep.subr.bf16.mxu0 0
    %664 = vmatpush1.bf16.xpose.msra.mxu0 0
    %665 = vmatprep.subr.bf16.mxu0 0
    %666 = vmatpush1.bf16.xpose.msra.mxu0 0
    %667 = vmatprep.subr.bf16.mxu0 0
    %668 = vmatpush1.bf16.xpose.msra.mxu0 0
    %669 = vmatprep.subr.bf16.mxu0 0
    %670 = vmatpush1.bf16.xpose.msra.mxu0 0
    %671 = vmatprep.subr.bf16.mxu0 0
    %672 = vmatpush1.bf16.xpose.msra.mxu0 0
    %673 = vmatprep.mubr.bf16.mxu0 0
    %674 = vmatmul.mubr.bf16.gmra.mrb[0].mxu0 %v636
    %v675 = vpop.f32.mrb[0].mxu0
    %v676 = vadd.f32 %v633, %v675
    %v677 = vpop.f32.mrb[0].mxu0
    %v678 = vpop.f32.mrb[0].mxu0
    %v679 = vpop.f32.mrb[0].mxu0
    %680 = vdwg.mxu0
    %v681 = vsub.f32 0.0, %v676
    %v682 = vmul.f32 %v681, 1.442695
    %v683 = vpow.pop %v682
    %v684 = vadd.f32 %v683, 1.0
    %v685 = vrcp.pop %v684
    %vm686 = vcmask 57344
    %687 = vst.msk [vmem:[#allocation9] sm:$0x1] %vm686, %v685
    // Predicated region
    $region30: #{dotanet_forward.1} parent=1 // pred_check
      _
    $region31: #{dotanet_forward.1} parent=1 // pred_check_branch
      %689 = sbr.rel (0) target = $region33
    $region32: #{dotanet_forward.1} parent=1 // pred_region
      %s691 = ssub.s32 16, 16
      %692 = vsyncadd [#allocation5], %s691
      %s694 = sshll.u32 [#allocation9], 4
      %s695 = int_to_ptr.vmem [resolvable:$true] %s694
      %697 = dma.vmem_to_hbm [thread:$0]  %s695, 16, %s4, [#allocation5]
    $region33: #{dotanet_forward.1} parent=1 // pred_fallthru
      _
    // Predicated region
    $region34: #{dotanet_forward.1} parent=1 // pred_check
      _
    $region35: #{dotanet_forward.1} parent=1 // pred_check_branch
      %699 = sbr.rel (0) target = $region37
    $region36: #{dotanet_forward.1} parent=1 // pred_region
      %700 = dma.done [#allocation5], 16
    $region37: #{dotanet_forward.1} parent=1 // pred_fallthru
      _
    %701 = vsyncpa [#allocation4], 1
    %702 = vsyncpa [#allocation7], 1
    %703 = vsyncpa [#allocation5], 1

</llo_original>
